<compile_context>
chip_gen: v7x
topology: tpu7x:2x2x1
jax: 0.10.0
libtpu: 0.0.40
codegen_flags: <defaults>
</compile_context>

<pallas_src>
import jax
import jax.numpy as jnp
from jax.experimental import pallas as pl
from jax.experimental.pallas import tpu as pltpu

INPUT_SIZE = 12
BATCH = 8
BN_EPS = 1e-5
WIDTH = 128        # padded lane width for every layer inside the kernel
MAX_TB = 256       # max batch-tile rows per grid step (fills v6e/v7x MXUs)


def _round_up(n, m):
    return ((n + m - 1) // m) * m


# ---------------------------------------------------------------------------
# Kernel
# ---------------------------------------------------------------------------
def lottery_kernel(x_ref, w_ref, b_ref, out_ref):
    # x_ref:   (TB, 128)  f32   zero-padded input tile
    # w_ref:   (4,128,128) bf16 padded, BN-folded, head-fused weights (resident)
    # b_ref:   (4,1,128)  f32   padded, BN-folded, head-fused biases (resident)
    # out_ref: (TB, 128)  f32   lane-dense output; cols 0..4 = main, 5 = lucky
    h = x_ref[...].astype(jnp.bfloat16)
    h = jnp.dot(h, w_ref[0], preferred_element_type=jnp.float32) + b_ref[0]
    h = jnp.maximum(h, 0.0)                                  # Linear(12,64)+ReLU
    h = jnp.dot(h.astype(jnp.bfloat16), w_ref[1],
                preferred_element_type=jnp.float32) + b_ref[1]
    h = jnp.maximum(h, 0.0)                                  # [BN1]+Linear(64,128)+ReLU
    h = jnp.dot(h.astype(jnp.bfloat16), w_ref[2],
                preferred_element_type=jnp.float32) + b_ref[2]
    h = jnp.maximum(h, 0.0)                                  # [BN2]+fused heads L1+ReLU
    out_ref[...] = (                                         # [BN3/BN4]+fused heads L2
        jnp.dot(h.astype(jnp.bfloat16), w_ref[3],
                preferred_element_type=jnp.float32) + b_ref[3]
    )


# ---------------------------------------------------------------------------
# Parameters (original PyTorch-shaped) and packing (fold + fuse + pad + bf16)
# ---------------------------------------------------------------------------
def make_params(key, input_size=INPUT_SIZE):
    """Deterministic synthetic parameters in un-folded (PyTorch-like) form.

    Linear weights stored as (in_features, out_features) so y = x @ W + b.
    BatchNorm params are random so the fold is non-trivially exercised.
    """
    keys = iter(jax.random.split(key, 32))

    def linear(fan_in, fan_out):
        bound = 1.0 / jnp.sqrt(fan_in)
        w = jax.random.uniform(next(keys), (fan_in, fan_out), jnp.float32, -bound, bound)
        b = jax.random.uniform(next(keys), (fan_out,), jnp.float32, -bound, bound)
        return w, b

    def bn(n):
        gamma = jax.random.uniform(next(keys), (n,), jnp.float32, 0.5, 1.5)
        beta = 0.1 * jax.random.normal(next(keys), (n,), jnp.float32)
        mean = 0.1 * jax.random.normal(next(keys), (n,), jnp.float32)
        var = jax.random.uniform(next(keys), (n,), jnp.float32, 0.5, 1.5)
        return gamma, beta, mean, var

    w1, b1 = linear(input_size, 64)
    g1, be1, m1, v1 = bn(64)
    w2, b2 = linear(64, 128)
    g2, be2, m2, v2 = bn(128)
    wm1, bm1 = linear(128, 64)
    g3, be3, m3, v3 = bn(64)
    wm2, bm2 = linear(64, 5)
    wl1, bl1 = linear(128, 32)
    g4, be4, m4, v4 = bn(32)
    wl2, bl2 = linear(32, 1)

    return (w1, b1, g1, be1, m1, v1,
            w2, b2, g2, be2, m2, v2,
            wm1, bm1, g3, be3, m3, v3,
            wm2, bm2,
            wl1, bl1, g4, be4, m4, v4,
            wl2, bl2)


def pack_params(params):
    """Fold BN into adjacent Linears, fuse heads, pad to 128x128, cast to bf16."""
    (w1, b1, g1, be1, m1, v1,
     w2, b2, g2, be2, m2, v2,
     wm1, bm1, g3, be3, m3, v3,
     wm2, bm2,
     wl1, bl1, g4, be4, m4, v4,
     wl2, bl2) = params

    def bn_fold(g, be, m, v):
        s = g / jnp.sqrt(v + BN_EPS)
        t = be - m * s
        return s, t

    s1, t1 = bn_fold(g1, be1, m1, v1)   # (64,)
    s2, t2 = bn_fold(g2, be2, m2, v2)   # (128,)
    s3, t3 = bn_fold(g3, be3, m3, v3)   # (64,)
    s4, t4 = bn_fold(g4, be4, m4, v4)   # (32,)

    # Layer 0: Linear(input,64) unchanged.
    W0, B0 = w1, b1

    # Layer 1: BN(64) folded into Linear(64,128).
    W1 = s1[:, None] * w2
    B1 = b2 + t1 @ w2

    # Layer 2: heads' first Linears fused (128 -> 96), BN(128) folded in.
    wh = jnp.concatenate([wm1, wl1], axis=1)          # (128, 96)
    bh = jnp.concatenate([bm1, bl1], axis=0)          # (96,)
    W2 = s2[:, None] * wh
    B2 = bh + t2 @ wh

    # Layer 3: heads' second Linears fused block-diagonally (96 -> 6),
    #          BN(64)/BN(32) folded in.  cols 0..4 = main, col 5 = lucky.
    wm2f = s3[:, None] * wm2
    bm2f = bm2 + t3 @ wm2
    wl2f = s4[:, None] * wl2
    bl2f = bl2 + t4 @ wl2
    W3 = jnp.zeros((96, 6), jnp.float32)
    W3 = W3.at[:64, :5].set(wm2f).at[64:, 5:].set(wl2f)
    B3 = jnp.concatenate([bm2f, bl2f], axis=0)        # (6,)

    def pad_w(w):
        out = jnp.zeros((WIDTH, WIDTH), jnp.float32)
        return out.at[: w.shape[0], : w.shape[1]].set(w)

    def pad_b(b):
        out = jnp.zeros((WIDTH,), jnp.float32)
        return out.at[: b.shape[0]].set(b)

    # bf16 weight slab (cast once, at pack time); biases stay f32.
    W = jnp.stack([pad_w(W0), pad_w(W1), pad_w(W2), pad_w(W3)]).astype(jnp.bfloat16)
    B = jnp.stack([pad_b(B0), pad_b(B1), pad_b(B2), pad_b(B3)])[:, None]  # (4,1,128)
    return W, B


# ---------------------------------------------------------------------------
# Wrapper
# ---------------------------------------------------------------------------
@jax.jit
def lottery_predictor_forward(x, W, B):
    batch, feat = x.shape
    # Batch tile: multiple of 16 (bf16 sublane packing), capped at MAX_TB rows.
    tb = min(MAX_TB, _round_up(max(batch, 1), 16))
    padded_batch = _round_up(batch, tb)
    grid = (padded_batch // tb,)

    # Lane-pad the input to 128 and sublane-pad the batch (zeros are inert:
    # padded weight rows are zero; padded rows are sliced away afterwards).
    x_pad = jnp.zeros((padded_batch, WIDTH), jnp.float32).at[:batch, :feat].set(x)

    cost = pl.CostEstimate(
        flops=2 * padded_batch * WIDTH * WIDTH * 4,
        transcendentals=0,
        bytes_accessed=(2 * 4 * WIDTH * WIDTH          # bf16 weight slab (once)
                        + 4 * 4 * WIDTH                # f32 bias slab (once)
                        + 4 * 2 * padded_batch * WIDTH),  # f32 x + out
    )

    out = pl.pallas_call(
        lottery_kernel,
        out_shape=jax.ShapeDtypeStruct((padded_batch, WIDTH), jnp.float32),
        grid=grid,
        in_specs=[
            pl.BlockSpec((tb, WIDTH), lambda i: (i, 0)),            # x tile
            pl.BlockSpec((4, WIDTH, WIDTH), lambda i: (0, 0, 0)),   # W resident
            pl.BlockSpec((4, 1, WIDTH), lambda i: (0, 0, 0)),       # B resident
        ],
        out_specs=pl.BlockSpec((tb, WIDTH), lambda i: (i, 0)),
        cost_estimate=cost,
        compiler_params=pltpu.CompilerParams(
            dimension_semantics=("parallel",)),
    )(x_pad, W, B)

    main_pred = out[:batch, :5]
    lucky_pred = out[:batch, 5:6]
    return main_pred, lucky_pred


# ---------------------------------------------------------------------------
# Pure-JAX fp32 reference (un-folded, un-fused) — eval semantics of the module
# ---------------------------------------------------------------------------
def reference_forward(x, params):
    (w1, b1, g1, be1, m1, v1,
     w2, b2, g2, be2, m2, v2,
     wm1, bm1, g3, be3, m3, v3,
     wm2, bm2,
     wl1, bl1, g4, be4, m4, v4,
     wl2, bl2) = params

    def bn(h, g, be, m, v):
        return (h - m) / jnp.sqrt(v + BN_EPS) * g + be

    h = jnp.maximum(x @ w1 + b1, 0.0)
    h = bn(h, g1, be1, m1, v1)            # Dropout(0.2): identity in eval mode
    h = jnp.maximum(h @ w2 + b2, 0.0)
    h = bn(h, g2, be2, m2, v2)            # Dropout(0.2): identity in eval mode

    mo = jnp.maximum(h @ wm1 + bm1, 0.0)
    mo = bn(mo, g3, be3, m3, v3)
    main = mo @ wm2 + bm2

    lo = jnp.maximum(h @ wl1 + bl1, 0.0)
    lo = bn(lo, g4, be4, m4, v4)
    lucky = lo @ wl2 + bl2
    return main, lucky


if __name__ == "__main__":
    key = jax.random.PRNGKey(0)
    kx, kp = jax.random.split(key)
    x = jax.random.normal(kx, (BATCH, INPUT_SIZE), jnp.float32)

    params = make_params(kp, INPUT_SIZE)
    W, B = pack_params(params)

    main_pred, lucky_pred = lottery_predictor_forward(x, W, B)
    jax.block_until_ready((main_pred, lucky_pred))

    ref_main, ref_lucky = reference_forward(x, params)
    assert main_pred.shape == (BATCH, 5)
    assert lucky_pred.shape == (BATCH, 1)
    # bf16 matmul inputs (f32 accumulation) vs fp32 reference -> relaxed tol.
    assert jnp.allclose(main_pred, ref_main, atol=5e-2, rtol=5e-2)
    assert jnp.allclose(lucky_pred, ref_lucky, atol=5e-2, rtol=5e-2)

    print("KERNEL_OK")
</pallas_src>

<mosaic_0001>
module attributes {stable_mosaic.version = 11 : i64} {
  func.func @lottery_kernel(%arg0: i32, %arg1: memref<16x128xf32, #tpu.memory_space<vmem>>, %arg2: memref<4x128x128xbf16, #tpu.memory_space<vmem>>, %arg3: memref<4x1x128xf32, #tpu.memory_space<vmem>>, %arg4: memref<16x128xf32, #tpu.memory_space<vmem>>) attributes {dimension_semantics = [#tpu.dimension_semantics<parallel>], iteration_bounds = array<i64: 1>, scalar_prefetch = 0 : i64, scratch_operands = 0 : i64, tpu.core_type = #tpu.core_type<tc>, window_params = [{transform_indices = @transform_0, window_bounds = array<i64: 16, 128>}, {pipeline_mode = #tpu.pipeline_mode<synchronous>, transform_indices = @transform_1, window_bounds = array<i64: 4, 128, 128>}, {pipeline_mode = #tpu.pipeline_mode<synchronous>, transform_indices = @transform_2, window_bounds = array<i64: 4, 1, 128>}, {transform_indices = @transform_3, window_bounds = array<i64: 16, 128>}]} {
    %c0 = arith.constant 0 : index
    %c0_0 = arith.constant 0 : index
    %0 = vector.load %arg1[%c0, %c0_0] : memref<16x128xf32, #tpu.memory_space<vmem>>, vector<16x128xf32>
    %1 = arith.truncf %0 : vector<16x128xf32> to vector<16x128xbf16>
    %c0_1 = arith.constant 0 : index
    %c0_2 = arith.constant 0 : index
    %c0_3 = arith.constant 0 : index
    %2 = vector.load %arg2[%c0_1, %c0_2, %c0_3] : memref<4x128x128xbf16, #tpu.memory_space<vmem>>, vector<1x128x128xbf16>
    %3 = vector.shape_cast %2 : vector<1x128x128xbf16> to vector<128x128xbf16>
    %cst = arith.constant dense<0.000000e+00> : vector<16x128xf32>
    %4 = tpu.matmul %1, %3, %cst {dimension_numbers = #tpu.dot_dimension_numbers<[1], [0], [0], [1], [0, 0, 1, 1], [], []>} : vector<16x128xbf16>, vector<128x128xbf16>, vector<16x128xf32> -> vector<16x128xf32>
    %c0_4 = arith.constant 0 : index
    %c0_5 = arith.constant 0 : index
    %c0_6 = arith.constant 0 : index
    %5 = vector.load %arg3[%c0_4, %c0_5, %c0_6] : memref<4x1x128xf32, #tpu.memory_space<vmem>>, vector<1x1x128xf32>
    %6 = vector.shape_cast %5 : vector<1x1x128xf32> to vector<1x128xf32>
    %7 = vector.broadcast %6 : vector<1x128xf32> to vector<16x128xf32>
    %8 = arith.addf %4, %7 : vector<16x128xf32>
    %cst_7 = arith.constant 0.000000e+00 : f32
    %9 = vector.broadcast %cst_7 : f32 to vector<16x128xf32>
    %10 = arith.maximumf %8, %9 : vector<16x128xf32>
    %11 = arith.truncf %10 : vector<16x128xf32> to vector<16x128xbf16>
    %c1 = arith.constant 1 : index
    %c0_8 = arith.constant 0 : index
    %c0_9 = arith.constant 0 : index
    %12 = vector.load %arg2[%c1, %c0_8, %c0_9] : memref<4x128x128xbf16, #tpu.memory_space<vmem>>, vector<1x128x128xbf16>
    %13 = vector.shape_cast %12 : vector<1x128x128xbf16> to vector<128x128xbf16>
    %cst_10 = arith.constant dense<0.000000e+00> : vector<16x128xf32>
    %14 = tpu.matmul %11, %13, %cst_10 {dimension_numbers = #tpu.dot_dimension_numbers<[1], [0], [0], [1], [0, 0, 1, 1], [], []>} : vector<16x128xbf16>, vector<128x128xbf16>, vector<16x128xf32> -> vector<16x128xf32>
    %c1_11 = arith.constant 1 : index
    %c0_12 = arith.constant 0 : index
    %c0_13 = arith.constant 0 : index
    %15 = vector.load %arg3[%c1_11, %c0_12, %c0_13] : memref<4x1x128xf32, #tpu.memory_space<vmem>>, vector<1x1x128xf32>
    %16 = vector.shape_cast %15 : vector<1x1x128xf32> to vector<1x128xf32>
    %17 = vector.broadcast %16 : vector<1x128xf32> to vector<16x128xf32>
    %18 = arith.addf %14, %17 : vector<16x128xf32>
    %cst_14 = arith.constant 0.000000e+00 : f32
    %19 = vector.broadcast %cst_14 : f32 to vector<16x128xf32>
    %20 = arith.maximumf %18, %19 : vector<16x128xf32>
    %21 = arith.truncf %20 : vector<16x128xf32> to vector<16x128xbf16>
    %c2 = arith.constant 2 : index
    %c0_15 = arith.constant 0 : index
    %c0_16 = arith.constant 0 : index
    %22 = vector.load %arg2[%c2, %c0_15, %c0_16] : memref<4x128x128xbf16, #tpu.memory_space<vmem>>, vector<1x128x128xbf16>
    %23 = vector.shape_cast %22 : vector<1x128x128xbf16> to vector<128x128xbf16>
    %cst_17 = arith.constant dense<0.000000e+00> : vector<16x128xf32>
    %24 = tpu.matmul %21, %23, %cst_17 {dimension_numbers = #tpu.dot_dimension_numbers<[1], [0], [0], [1], [0, 0, 1, 1], [], []>} : vector<16x128xbf16>, vector<128x128xbf16>, vector<16x128xf32> -> vector<16x128xf32>
    %c2_18 = arith.constant 2 : index
    %c0_19 = arith.constant 0 : index
    %c0_20 = arith.constant 0 : index
    %25 = vector.load %arg3[%c2_18, %c0_19, %c0_20] : memref<4x1x128xf32, #tpu.memory_space<vmem>>, vector<1x1x128xf32>
    %26 = vector.shape_cast %25 : vector<1x1x128xf32> to vector<1x128xf32>
    %27 = vector.broadcast %26 : vector<1x128xf32> to vector<16x128xf32>
    %28 = arith.addf %24, %27 : vector<16x128xf32>
    %cst_21 = arith.constant 0.000000e+00 : f32
    %29 = vector.broadcast %cst_21 : f32 to vector<16x128xf32>
    %30 = arith.maximumf %28, %29 : vector<16x128xf32>
    %31 = arith.truncf %30 : vector<16x128xf32> to vector<16x128xbf16>
    %c3 = arith.constant 3 : index
    %c0_22 = arith.constant 0 : index
    %c0_23 = arith.constant 0 : index
    %32 = vector.load %arg2[%c3, %c0_22, %c0_23] : memref<4x128x128xbf16, #tpu.memory_space<vmem>>, vector<1x128x128xbf16>
    %33 = vector.shape_cast %32 : vector<1x128x128xbf16> to vector<128x128xbf16>
    %cst_24 = arith.constant dense<0.000000e+00> : vector<16x128xf32>
    %34 = tpu.matmul %31, %33, %cst_24 {dimension_numbers = #tpu.dot_dimension_numbers<[1], [0], [0], [1], [0, 0, 1, 1], [], []>} : vector<16x128xbf16>, vector<128x128xbf16>, vector<16x128xf32> -> vector<16x128xf32>
    %c3_25 = arith.constant 3 : index
    %c0_26 = arith.constant 0 : index
    %c0_27 = arith.constant 0 : index
    %35 = vector.load %arg3[%c3_25, %c0_26, %c0_27] : memref<4x1x128xf32, #tpu.memory_space<vmem>>, vector<1x1x128xf32>
    %36 = vector.shape_cast %35 : vector<1x1x128xf32> to vector<1x128xf32>
    %37 = vector.broadcast %36 : vector<1x128xf32> to vector<16x128xf32>
    %38 = arith.addf %34, %37 : vector<16x128xf32>
    %c0_28 = arith.constant 0 : index
    %c0_29 = arith.constant 0 : index
    %39 = vector.load %arg4[%c0_28, %c0_29] : memref<16x128xf32, #tpu.memory_space<vmem>>, vector<16x128xf32>
    tpu.vector_store %arg4[%c0_28, %c0_29], %38 {strides = array<i32>} : memref<16x128xf32, #tpu.memory_space<vmem>>, vector<16x128xf32>,
    return
  }
  func.func @transform_0(%arg0: i32) -> (i32, i32) {
    %c0_i32 = arith.constant 0 : i32
    %c0_i32_0 = arith.constant 0 : i32
    return %arg0, %c0_i32 : i32, i32
  }
  func.func @transform_1(%arg0: i32) -> (i32, i32, i32) {
    %c0_i32 = arith.constant 0 : i32
    %c0_i32_0 = arith.constant 0 : i32
    %c0_i32_1 = arith.constant 0 : i32
    %c0_i32_2 = arith.constant 0 : i32
    return %c0_i32, %c0_i32_0, %c0_i32_1 : i32, i32, i32
  }
  func.func @transform_2(%arg0: i32) -> (i32, i32, i32) {
    %c0_i32 = arith.constant 0 : i32
    %c0_i32_0 = arith.constant 0 : i32
    %c0_i32_1 = arith.constant 0 : i32
    %c0_i32_2 = arith.constant 0 : i32
    return %c0_i32, %c0_i32_0, %c0_i32_1 : i32, i32, i32
  }
  func.func @transform_3(%arg0: i32) -> (i32, i32) {
    %c0_i32 = arith.constant 0 : i32
    %c0_i32_0 = arith.constant 0 : i32
    return %arg0, %c0_i32 : i32, i32
  }
}

</mosaic_0001>

<llo_original>
// kernel: lottery_predictor_forward.1
$region0: #{lottery_predictor_forward.1}
  #allocation0 [shape = 'u32[]', space=smem, size = 0x4, offset = 0x4, fixed_abs, tag = 'smem constant byte address 0x4 - core index']
  #allocation1 [shape = 'u32[144,128]{1,0:T(1,128)}', space=vmem, size = 0x12000, scoped, tag = 'internal scratch']
  %s0 = inlined_call_operand.vmem [shape: f32[16,128], index: 0, kind: input, shape index: {}]
  %s1 = inlined_call_operand.hbm [shape: bf16[4,128,128], index: 1, kind: input, shape index: {}]
  %s2 = inlined_call_operand.vmem [shape: f32[4,1,128], index: 2, kind: input, shape index: {}]
  %s3 = inlined_call_operand.vmem [shape: f32[16,128], index: 3, kind: output, shape index: {}]
  %s4 = sld [smem:[#allocation0]]
  $region26: #{lottery_predictor_forward.1} parent=0
    _
  %s6 = ssub.s32 1, %s4
  %s7 = scalar_select 0, %s6, %s4
  $region1: #{lottery_predictor_forward.1} parent=0
    #allocation2 [shape = 'u8[131072]{0}', space=vmem, size = 0x20000, scoped, tag = 'input window, operand 1, single buffered']
    #allocation3 [shape = 's32[1]{0}', space=sflag, size = 0x4, scoped, tag = 'scoped memory for lottery_predictor_forward.1']
    %8 = vsyncpa [#allocation3], 0
    // Predicated region
    $region2: #{lottery_predictor_forward.1} parent=1 // pred_check
      _
    $region3: #{lottery_predictor_forward.1} parent=1 // pred_check_branch
      %10 = sbr.rel (0) target = $region5
    $region4: #{lottery_predictor_forward.1} parent=1 // pred_region
      _
    $region5: #{lottery_predictor_forward.1} parent=1 // pred_fallthru
      _
    // Predicated region
    $region6: #{lottery_predictor_forward.1} parent=1 // pred_check
      _
    $region7: #{lottery_predictor_forward.1} parent=1 // pred_check_branch
      %12 = sbr.rel (0) target = $region9
    $region8: #{lottery_predictor_forward.1} parent=1 // pred_region
      %s14 = ssub.s32 4096, 4096
      %15 = vsyncadd [#allocation3], %s14
      %s16 = sshll.u32 [#allocation2], 4
      %s17 = int_to_ptr.vmem [resolvable:$true] %s16
      %22 = dma.hbm_to_vmem [thread:$0]  %s1, 4096, %s17, [#allocation3], 64, 64, 4
    $region9: #{lottery_predictor_forward.1} parent=1 // pred_fallthru
      _
    // Predicated region
    $region10: #{lottery_predictor_forward.1} parent=1 // pred_check
      _
    $region11: #{lottery_predictor_forward.1} parent=1 // pred_check_branch
      %24 = sbr.rel (0) target = $region13
    $region12: #{lottery_predictor_forward.1} parent=1 // pred_region
      _
    $region13: #{lottery_predictor_forward.1} parent=1 // pred_fallthru
      _
    // Predicated region
    $region14: #{lottery_predictor_forward.1} parent=1 // pred_check
      _
    $region15: #{lottery_predictor_forward.1} parent=1 // pred_check_branch
      %26 = sbr.rel (0) target = $region17
    $region16: #{lottery_predictor_forward.1} parent=1 // pred_region
      %27 = dma.done [#allocation3], 4096
    $region17: #{lottery_predictor_forward.1} parent=1 // pred_fallthru
      _
    %v29 = vld [vmem:[%s0] sm:$0xff]
    %v30 = vld [vmem:[%s0 + $0x8] sm:$0xff]
    %v31 = vpack.c.bf16 %v30, %v29
    %v32 = vld [vmem:[#allocation2] sm:$0xf]
    %v33 = vld [vmem:[#allocation2 + $0x4] sm:$0xf]
    %v34 = vld [vmem:[#allocation2 + $0x8] sm:$0xf]
    %v35 = vld [vmem:[#allocation2 + $0xc] sm:$0xf]
    %v36 = vld [vmem:[#allocation2 + $0x10] sm:$0xf]
    %v37 = vld [vmem:[#allocation2 + $0x14] sm:$0xf]
    %v38 = vld [vmem:[#allocation2 + $0x18] sm:$0xf]
    %v39 = vld [vmem:[#allocation2 + $0x1c] sm:$0xf]
    %v40 = vld [vmem:[#allocation2 + $0x20] sm:$0xf]
    %v41 = vld [vmem:[#allocation2 + $0x24] sm:$0xf]
    %v42 = vld [vmem:[#allocation2 + $0x28] sm:$0xf]
    %v43 = vld [vmem:[#allocation2 + $0x2c] sm:$0xf]
    %v44 = vld [vmem:[#allocation2 + $0x30] sm:$0xf]
    %v45 = vld [vmem:[#allocation2 + $0x34] sm:$0xf]
    %v46 = vld [vmem:[#allocation2 + $0x38] sm:$0xf]
    %v47 = vld [vmem:[#allocation2 + $0x3c] sm:$0xf]
    %v48 = vld [vmem:[%s2] sm:$0x1]
    %v50 = vlaneseq
    %v51 = vshrl.u32 %v50, 7
    %v52 = vsub.s32 0, %v51
    %v53 = vrot.slane %v48, %v52
    %v71 = vunpack.c.l.b16 %v32
    %v72 = vunpack.c.l.b16 %v33
    %v73 = vunpack.c.l.b16 %v34
    %v74 = vunpack.c.l.b16 %v35
    %v75 = vunpack.c.l.b16 %v36
    %v76 = vunpack.c.l.b16 %v37
    %v77 = vunpack.c.l.b16 %v38
    %v78 = vunpack.c.l.b16 %v39
    %v79 = vunpack.c.l.b16 %v40
    %v80 = vunpack.c.l.b16 %v41
    %v81 = vunpack.c.l.b16 %v42
    %v82 = vunpack.c.l.b16 %v43
    %v83 = vunpack.c.l.b16 %v44
    %v84 = vunpack.c.l.b16 %v45
    %v85 = vunpack.c.l.b16 %v46
    %v86 = vunpack.c.l.b16 %v47
    %v87 = vpack.c.b16 %v72, %v71
    %v88 = vpack.c.b16 %v74, %v73
    %v89 = vpack.c.b16 %v76, %v75
    %v90 = vpack.c.b16 %v78, %v77
    %v91 = vpack.c.b16 %v80, %v79
    %v92 = vpack.c.b16 %v82, %v81
    %v93 = vpack.c.b16 %v84, %v83
    %v94 = vpack.c.b16 %v86, %v85
    %103 = vmatprep.subr.bf16.mxu0 0
    %104 = vmatpush1.bf16.msra.mxu0 %v87
    %105 = vmatprep.subr.bf16.mxu0 0
    %106 = vmatpush1.bf16.msra.mxu0 %v88
    %107 = vmatprep.subr.bf16.mxu0 0
    %108 = vmatpush1.bf16.msra.mxu0 %v89
    %109 = vmatprep.subr.bf16.mxu0 0
    %110 = vmatpush1.bf16.msra.mxu0 %v90
    %111 = vmatprep.subr.bf16.mxu0 0
    %112 = vmatpush1.bf16.msra.mxu0 %v91
    %113 = vmatprep.subr.bf16.mxu0 0
    %114 = vmatpush1.bf16.msra.mxu0 %v92
    %115 = vmatprep.subr.bf16.mxu0 0
    %116 = vmatpush1.bf16.msra.mxu0 %v93
    %117 = vmatprep.subr.bf16.mxu0 0
    %118 = vmatpush1.bf16.msra.mxu0 %v94
    %119 = vmatprep.subr.bf16.mxu0 0
    %120 = vmatpush1.bf16.msra.mxu0 0
    %121 = vmatprep.subr.bf16.mxu0 0
    %122 = vmatpush1.bf16.msra.mxu0 0
    %123 = vmatprep.subr.bf16.mxu0 0
    %124 = vmatpush1.bf16.msra.mxu0 0
    %125 = vmatprep.subr.bf16.mxu0 0
    %126 = vmatpush1.bf16.msra.mxu0 0
    %127 = vmatprep.subr.bf16.mxu0 0
    %128 = vmatpush1.bf16.msra.mxu0 0
    %129 = vmatprep.subr.bf16.mxu0 0
    %130 = vmatpush1.bf16.msra.mxu0 0
    %131 = vmatprep.subr.bf16.mxu0 0
    %132 = vmatpush1.bf16.msra.mxu0 0
    %133 = vmatprep.subr.bf16.mxu0 0
    %134 = vmatpush1.bf16.msra.mxu0 0
    %135 = vmatprep.mubr.bf16.mxu0 0
    %136 = vmatmul.mubr.bf16.gmra.mrb[0].mxu0 %v31
    %v137 = vpop.f32.mrb[0].mxu0
    %v138 = vadd.f32 %v53, %v137
    %v139 = vpop.f32.mrb[0].mxu0
    %v140 = vpop.f32.mrb[0].mxu0
    %v141 = vadd.f32 %v53, %v140
    %v142 = vpop.f32.mrb[0].mxu0
    %143 = vdwg.mxu0
    %v144 = vmax.f32 %v138, 0.0
    %v145 = vmax.f32 %v141, 0.0
    %v146 = vpack.c.bf16 %v145, %v144
    %s147 = scalar_lea.vmem [#allocation2], 64
    %v148 = vld [vmem:[%s147] sm:$0xf]
    %v149 = vld [vmem:[%s147 + $0x4] sm:$0xf]
    %v150 = vld [vmem:[%s147 + $0x8] sm:$0xf]
    %v151 = vld [vmem:[%s147 + $0xc] sm:$0xf]
    %v152 = vld [vmem:[%s147 + $0x10] sm:$0xf]
    %v153 = vld [vmem:[%s147 + $0x14] sm:$0xf]
    %v154 = vld [vmem:[%s147 + $0x18] sm:$0xf]
    %v155 = vld [vmem:[%s147 + $0x1c] sm:$0xf]
    %v156 = vld [vmem:[%s147 + $0x20] sm:$0xf]
    %v157 = vld [vmem:[%s147 + $0x24] sm:$0xf]
    %v158 = vld [vmem:[%s147 + $0x28] sm:$0xf]
    %v159 = vld [vmem:[%s147 + $0x2c] sm:$0xf]
    %v160 = vld [vmem:[%s147 + $0x30] sm:$0xf]
    %v161 = vld [vmem:[%s147 + $0x34] sm:$0xf]
    %v162 = vld [vmem:[%s147 + $0x38] sm:$0xf]
    %v163 = vld [vmem:[%s147 + $0x3c] sm:$0xf]
    %s164 = scalar_lea.vmem %s2, 1
    %v165 = vld [vmem:[%s164] sm:$0x1]
    %v167 = vlaneseq
    %v168 = vshrl.u32 %v167, 7
    %v169 = vsub.s32 0, %v168
    %v170 = vrot.slane %v165, %v169
    %v188 = vunpack.c.l.b16 %v148
    %v189 = vunpack.c.l.b16 %v149
    %v190 = vunpack.c.l.b16 %v150
    %v191 = vunpack.c.l.b16 %v151
    %v192 = vunpack.c.l.b16 %v152
    %v193 = vunpack.c.l.b16 %v153
    %v194 = vunpack.c.l.b16 %v154
    %v195 = vunpack.c.l.b16 %v155
    %v196 = vunpack.c.l.b16 %v156
    %v197 = vunpack.c.l.b16 %v157
    %v198 = vunpack.c.l.b16 %v158
    %v199 = vunpack.c.l.b16 %v159
    %v200 = vunpack.c.l.b16 %v160
    %v201 = vunpack.c.l.b16 %v161
    %v202 = vunpack.c.l.b16 %v162
    %v203 = vunpack.c.l.b16 %v163
    %v204 = vpack.c.b16 %v189, %v188
    %v205 = vpack.c.b16 %v191, %v190
    %v206 = vpack.c.b16 %v193, %v192
    %v207 = vpack.c.b16 %v195, %v194
    %v208 = vpack.c.b16 %v197, %v196
    %v209 = vpack.c.b16 %v199, %v198
    %v210 = vpack.c.b16 %v201, %v200
    %v211 = vpack.c.b16 %v203, %v202
    %220 = vmatprep.subr.bf16.mxu0 0
    %221 = vmatpush1.bf16.msra.mxu0 %v204
    %222 = vmatprep.subr.bf16.mxu0 0
    %223 = vmatpush1.bf16.msra.mxu0 %v205
    %224 = vmatprep.subr.bf16.mxu0 0
    %225 = vmatpush1.bf16.msra.mxu0 %v206
    %226 = vmatprep.subr.bf16.mxu0 0
    %227 = vmatpush1.bf16.msra.mxu0 %v207
    %228 = vmatprep.subr.bf16.mxu0 0
    %229 = vmatpush1.bf16.msra.mxu0 %v208
    %230 = vmatprep.subr.bf16.mxu0 0
    %231 = vmatpush1.bf16.msra.mxu0 %v209
    %232 = vmatprep.subr.bf16.mxu0 0
    %233 = vmatpush1.bf16.msra.mxu0 %v210
    %234 = vmatprep.subr.bf16.mxu0 0
    %235 = vmatpush1.bf16.msra.mxu0 %v211
    %236 = vmatprep.subr.bf16.mxu0 0
    %237 = vmatpush1.bf16.msra.mxu0 0
    %238 = vmatprep.subr.bf16.mxu0 0
    %239 = vmatpush1.bf16.msra.mxu0 0
    %240 = vmatprep.subr.bf16.mxu0 0
    %241 = vmatpush1.bf16.msra.mxu0 0
    %242 = vmatprep.subr.bf16.mxu0 0
    %243 = vmatpush1.bf16.msra.mxu0 0
    %244 = vmatprep.subr.bf16.mxu0 0
    %245 = vmatpush1.bf16.msra.mxu0 0
    %246 = vmatprep.subr.bf16.mxu0 0
    %247 = vmatpush1.bf16.msra.mxu0 0
    %248 = vmatprep.subr.bf16.mxu0 0
    %249 = vmatpush1.bf16.msra.mxu0 0
    %250 = vmatprep.subr.bf16.mxu0 0
    %251 = vmatpush1.bf16.msra.mxu0 0
    %252 = vmatprep.mubr.bf16.mxu0 0
    %253 = vmatmul.mubr.bf16.gmra.mrb[0].mxu0 %v146
    %v254 = vpop.f32.mrb[0].mxu0
    %v255 = vadd.f32 %v170, %v254
    %v256 = vpop.f32.mrb[0].mxu0
    %v257 = vpop.f32.mrb[0].mxu0
    %v258 = vadd.f32 %v170, %v257
    %v259 = vpop.f32.mrb[0].mxu0
    %260 = vdwg.mxu0
    %v261 = vmax.f32 %v255, 0.0
    %v262 = vmax.f32 %v258, 0.0
    %v263 = vpack.c.bf16 %v262, %v261
    %s264 = scalar_lea.vmem [#allocation2], 128
    %v265 = vld [vmem:[%s264] sm:$0xf]
    %v266 = vld [vmem:[%s264 + $0x4] sm:$0xf]
    %v267 = vld [vmem:[%s264 + $0x8] sm:$0xf]
    %v268 = vld [vmem:[%s264 + $0xc] sm:$0xf]
    %v269 = vld [vmem:[%s264 + $0x10] sm:$0xf]
    %v270 = vld [vmem:[%s264 + $0x14] sm:$0xf]
    %v271 = vld [vmem:[%s264 + $0x18] sm:$0xf]
    %v272 = vld [vmem:[%s264 + $0x1c] sm:$0xf]
    %v273 = vld [vmem:[%s264 + $0x20] sm:$0xf]
    %v274 = vld [vmem:[%s264 + $0x24] sm:$0xf]
    %v275 = vld [vmem:[%s264 + $0x28] sm:$0xf]
    %v276 = vld [vmem:[%s264 + $0x2c] sm:$0xf]
    %v277 = vld [vmem:[%s264 + $0x30] sm:$0xf]
    %v278 = vld [vmem:[%s264 + $0x34] sm:$0xf]
    %v279 = vld [vmem:[%s264 + $0x38] sm:$0xf]
    %v280 = vld [vmem:[%s264 + $0x3c] sm:$0xf]
    %s281 = scalar_lea.vmem %s2, 2
    %v282 = vld [vmem:[%s281] sm:$0x1]
    %v284 = vlaneseq
    %v285 = vshrl.u32 %v284, 7
    %v286 = vsub.s32 0, %v285
    %v287 = vrot.slane %v282, %v286
    %v305 = vunpack.c.l.b16 %v265
    %v306 = vunpack.c.l.b16 %v266
    %v307 = vunpack.c.l.b16 %v267
    %v308 = vunpack.c.l.b16 %v268
    %v309 = vunpack.c.l.b16 %v269
    %v310 = vunpack.c.l.b16 %v270
    %v311 = vunpack.c.l.b16 %v271
    %v312 = vunpack.c.l.b16 %v272
    %v313 = vunpack.c.l.b16 %v273
    %v314 = vunpack.c.l.b16 %v274
    %v315 = vunpack.c.l.b16 %v275
    %v316 = vunpack.c.l.b16 %v276
    %v317 = vunpack.c.l.b16 %v277
    %v318 = vunpack.c.l.b16 %v278
    %v319 = vunpack.c.l.b16 %v279
    %v320 = vunpack.c.l.b16 %v280
    %v321 = vpack.c.b16 %v306, %v305
    %v322 = vpack.c.b16 %v308, %v307
    %v323 = vpack.c.b16 %v310, %v309
    %v324 = vpack.c.b16 %v312, %v311
    %v325 = vpack.c.b16 %v314, %v313
    %v326 = vpack.c.b16 %v316, %v315
    %v327 = vpack.c.b16 %v318, %v317
    %v328 = vpack.c.b16 %v320, %v319
    %337 = vmatprep.subr.bf16.mxu0 0
    %338 = vmatpush1.bf16.msra.mxu0 %v321
    %339 = vmatprep.subr.bf16.mxu0 0
    %340 = vmatpush1.bf16.msra.mxu0 %v322
    %341 = vmatprep.subr.bf16.mxu0 0
    %342 = vmatpush1.bf16.msra.mxu0 %v323
    %343 = vmatprep.subr.bf16.mxu0 0
    %344 = vmatpush1.bf16.msra.mxu0 %v324
    %345 = vmatprep.subr.bf16.mxu0 0
    %346 = vmatpush1.bf16.msra.mxu0 %v325
    %347 = vmatprep.subr.bf16.mxu0 0
    %348 = vmatpush1.bf16.msra.mxu0 %v326
    %349 = vmatprep.subr.bf16.mxu0 0
    %350 = vmatpush1.bf16.msra.mxu0 %v327
    %351 = vmatprep.subr.bf16.mxu0 0
    %352 = vmatpush1.bf16.msra.mxu0 %v328
    %353 = vmatprep.subr.bf16.mxu0 0
    %354 = vmatpush1.bf16.msra.mxu0 0
    %355 = vmatprep.subr.bf16.mxu0 0
    %356 = vmatpush1.bf16.msra.mxu0 0
    %357 = vmatprep.subr.bf16.mxu0 0
    %358 = vmatpush1.bf16.msra.mxu0 0
    %359 = vmatprep.subr.bf16.mxu0 0
    %360 = vmatpush1.bf16.msra.mxu0 0
    %361 = vmatprep.subr.bf16.mxu0 0
    %362 = vmatpush1.bf16.msra.mxu0 0
    %363 = vmatprep.subr.bf16.mxu0 0
    %364 = vmatpush1.bf16.msra.mxu0 0
    %365 = vmatprep.subr.bf16.mxu0 0
    %366 = vmatpush1.bf16.msra.mxu0 0
    %367 = vmatprep.subr.bf16.mxu0 0
    %368 = vmatpush1.bf16.msra.mxu0 0
    %369 = vmatprep.mubr.bf16.mxu0 0
    %370 = vmatmul.mubr.bf16.gmra.mrb[0].mxu0 %v263
    %v371 = vpop.f32.mrb[0].mxu0
    %v372 = vadd.f32 %v287, %v371
    %v373 = vpop.f32.mrb[0].mxu0
    %v374 = vpop.f32.mrb[0].mxu0
    %v375 = vadd.f32 %v287, %v374
    %v376 = vpop.f32.mrb[0].mxu0
    %377 = vdwg.mxu0
    %v378 = vmax.f32 %v372, 0.0
    %v379 = vmax.f32 %v375, 0.0
    %v380 = vpack.c.bf16 %v379, %v378
    %s381 = scalar_lea.vmem [#allocation2], 192
    %v382 = vld [vmem:[%s381] sm:$0xf]
    %v383 = vld [vmem:[%s381 + $0x4] sm:$0xf]
    %v384 = vld [vmem:[%s381 + $0x8] sm:$0xf]
    %v385 = vld [vmem:[%s381 + $0xc] sm:$0xf]
    %v386 = vld [vmem:[%s381 + $0x10] sm:$0xf]
    %v387 = vld [vmem:[%s381 + $0x14] sm:$0xf]
    %v388 = vld [vmem:[%s381 + $0x18] sm:$0xf]
    %v389 = vld [vmem:[%s381 + $0x1c] sm:$0xf]
    %v390 = vld [vmem:[%s381 + $0x20] sm:$0xf]
    %v391 = vld [vmem:[%s381 + $0x24] sm:$0xf]
    %v392 = vld [vmem:[%s381 + $0x28] sm:$0xf]
    %v393 = vld [vmem:[%s381 + $0x2c] sm:$0xf]
    %v394 = vld [vmem:[%s381 + $0x30] sm:$0xf]
    %v395 = vld [vmem:[%s381 + $0x34] sm:$0xf]
    %v396 = vld [vmem:[%s381 + $0x38] sm:$0xf]
    %v397 = vld [vmem:[%s381 + $0x3c] sm:$0xf]
    %s398 = scalar_lea.vmem %s2, 3
    %v399 = vld [vmem:[%s398] sm:$0x1]
    %v401 = vlaneseq
    %v402 = vshrl.u32 %v401, 7
    %v403 = vsub.s32 0, %v402
    %v404 = vrot.slane %v399, %v403
    %v422 = vunpack.c.l.b16 %v382
    %v423 = vunpack.c.l.b16 %v383
    %v424 = vunpack.c.l.b16 %v384
    %v425 = vunpack.c.l.b16 %v385
    %v426 = vunpack.c.l.b16 %v386
    %v427 = vunpack.c.l.b16 %v387
    %v428 = vunpack.c.l.b16 %v388
    %v429 = vunpack.c.l.b16 %v389
    %v430 = vunpack.c.l.b16 %v390
    %v431 = vunpack.c.l.b16 %v391
    %v432 = vunpack.c.l.b16 %v392
    %v433 = vunpack.c.l.b16 %v393
    %v434 = vunpack.c.l.b16 %v394
    %v435 = vunpack.c.l.b16 %v395
    %v436 = vunpack.c.l.b16 %v396
    %v437 = vunpack.c.l.b16 %v397
    %v438 = vpack.c.b16 %v423, %v422
    %v439 = vpack.c.b16 %v425, %v424
    %v440 = vpack.c.b16 %v427, %v426
    %v441 = vpack.c.b16 %v429, %v428
    %v442 = vpack.c.b16 %v431, %v430
    %v443 = vpack.c.b16 %v433, %v432
    %v444 = vpack.c.b16 %v435, %v434
    %v445 = vpack.c.b16 %v437, %v436
    %454 = vmatprep.subr.bf16.mxu0 0
    %455 = vmatpush1.bf16.msra.mxu0 %v438
    %456 = vmatprep.subr.bf16.mxu0 0
    %457 = vmatpush1.bf16.msra.mxu0 %v439
    %458 = vmatprep.subr.bf16.mxu0 0
    %459 = vmatpush1.bf16.msra.mxu0 %v440
    %460 = vmatprep.subr.bf16.mxu0 0
    %461 = vmatpush1.bf16.msra.mxu0 %v441
    %462 = vmatprep.subr.bf16.mxu0 0
    %463 = vmatpush1.bf16.msra.mxu0 %v442
    %464 = vmatprep.subr.bf16.mxu0 0
    %465 = vmatpush1.bf16.msra.mxu0 %v443
    %466 = vmatprep.subr.bf16.mxu0 0
    %467 = vmatpush1.bf16.msra.mxu0 %v444
    %468 = vmatprep.subr.bf16.mxu0 0
    %469 = vmatpush1.bf16.msra.mxu0 %v445
    %470 = vmatprep.subr.bf16.mxu0 0
    %471 = vmatpush1.bf16.msra.mxu0 0
    %472 = vmatprep.subr.bf16.mxu0 0
    %473 = vmatpush1.bf16.msra.mxu0 0
    %474 = vmatprep.subr.bf16.mxu0 0
    %475 = vmatpush1.bf16.msra.mxu0 0
    %476 = vmatprep.subr.bf16.mxu0 0
    %477 = vmatpush1.bf16.msra.mxu0 0
    %478 = vmatprep.subr.bf16.mxu0 0
    %479 = vmatpush1.bf16.msra.mxu0 0
    %480 = vmatprep.subr.bf16.mxu0 0
    %481 = vmatpush1.bf16.msra.mxu0 0
    %482 = vmatprep.subr.bf16.mxu0 0
    %483 = vmatpush1.bf16.msra.mxu0 0
    %484 = vmatprep.subr.bf16.mxu0 0
    %485 = vmatpush1.bf16.msra.mxu0 0
    %486 = vmatprep.mubr.bf16.mxu0 0
    %487 = vmatmul.mubr.bf16.gmra.mrb[0].mxu0 %v380
    %v488 = vpop.f32.mrb[0].mxu0
    %v489 = vadd.f32 %v404, %v488
    %v490 = vpop.f32.mrb[0].mxu0
    %v491 = vpop.f32.mrb[0].mxu0
    %v492 = vadd.f32 %v404, %v491
    %v493 = vpop.f32.mrb[0].mxu0
    %494 = vdwg.mxu0
    %495 = vst [vmem:[%s3] sm:$0xff] %v489
    %496 = vst [vmem:[%s3 + $0x8] sm:$0xff] %v492
    // Predicated region
    $region18: #{lottery_predictor_forward.1} parent=1 // pred_check
      _
    $region19: #{lottery_predictor_forward.1} parent=1 // pred_check_branch
      %498 = sbr.rel (0) target = $region21
    $region20: #{lottery_predictor_forward.1} parent=1 // pred_region
      _
    $region21: #{lottery_predictor_forward.1} parent=1 // pred_fallthru
      _
    // Predicated region
    $region22: #{lottery_predictor_forward.1} parent=1 // pred_check
      _
    $region23: #{lottery_predictor_forward.1} parent=1 // pred_check_branch
      %500 = sbr.rel (0) target = $region25
    $region24: #{lottery_predictor_forward.1} parent=1 // pred_region
      _
    $region25: #{lottery_predictor_forward.1} parent=1 // pred_fallthru
      _
    %501 = vsyncpa [#allocation3], 1

</llo_original>
